<compile_context>
chip_gen: v5e
topology: v5e:2x2
jax: 0.10.0
libtpu: 0.0.40
codegen_flags: <defaults>
</compile_context>

<pallas_src>
import functools

import jax
import jax.numpy as jnp
from jax.experimental import pallas as pl
from jax.experimental.pallas import tpu as pltpu


def _round_up(x, m):
    return (x + m - 1) // m * m


_VMEM = pl.BlockSpec(memory_space=pltpu.MemorySpace.VMEM)


# ----------------------------------------------------------------------------
# Fused kernel: 3 branches + both weighted combines, one pallas_call, no grid
# ----------------------------------------------------------------------------
def _vae_fused_kernel(
    x_ref,       # [B, DP]   f32  omics1|omics2|omics3, zero-padded to DP
    eps_ref,     # [B, HP]   f32  reparameterization noise, zero-padded
    we_ref,      # [DP, HP]  bf16 block-diagonal encoder weights
    wh_ref,      # [HP, 2HP] bf16 block-diag mu|log_var heads + latent_data fold
    wd_ref,      # [HP, DDP] bf16 block-diag decoders + latent_data_z fold
    misc_ref,    # [3, 2HP+DDP] f32  row0=gamma, row1=beta, row2=b_head|b_dec
    heads_ref,   # out [B, 2HP] f32: mu1|mu2|mu3|latent_data|0 | lv1|lv2|lv3|0
    dec_ref,     # out [B, DDP] f32: dec1|dec2|dec3|latent_data_z|0
    *, HP,
):
    x = x_ref[...]

    # ---- encoders (all branches): Linear -> BatchNorm1d (batch stats) --------
    # Encoder Linear bias is omitted on purpose: training-mode BN subtracts the
    # batch mean, which cancels a per-column constant bias exactly.
    y = jnp.dot(x.astype(jnp.bfloat16), we_ref[...],
                preferred_element_type=jnp.float32)            # [B, HP] f32
    mean = jnp.mean(y, axis=0, keepdims=True)
    diff = y - mean
    var = jnp.mean(diff * diff, axis=0, keepdims=True)         # biased batch var
    gamma = misc_ref[0:1, 0:HP]
    beta = misc_ref[1:2, 0:HP]
    pre = gamma * (diff * jax.lax.rsqrt(var + 1e-5)) + beta
    # Exact sigmoid (f32 VPU/EUP); pad lanes become 0.5 but only feed zero
    # rows of w_head, so they are inert.
    enc = 1.0 / (1.0 + jnp.exp(-pre))                          # [B, HP] f32

    # ---- mu / log_var heads + latent_data fold, ONE block-diagonal matmul ----
    b_head = misc_ref[2:3, 0:2 * HP]
    heads = jnp.dot(enc.astype(jnp.bfloat16), wh_ref[...],
                    preferred_element_type=jnp.float32) + b_head
    heads_ref[...] = heads                                     # lane-dense store

    mu = heads[:, :HP]     # mu1|mu2|mu3 | latent_data | 0   (vreg-aligned split)
    lv = heads[:, HP:]     # lv1|lv2|lv3 | 0

    # ---- reparameterize (pad lanes: latent_data + 0*exp(0) = latent_data,
    #      which stays inert through w_dec because its rows [3H, HP) are 0) ----
    z = mu + eps_ref[...] * jnp.exp(0.5 * lv)                  # [B, HP] f32

    # ---- decoders + latent_data_z fold, ONE block-diagonal matmul ------------
    b_dec = misc_ref[2:3, 2 * HP:]
    dec_ref[...] = (
        jnp.dot(z.astype(jnp.bfloat16), wd_ref[...],
                preferred_element_type=jnp.float32) + b_dec
    )


# ----------------------------------------------------------------------------
# Wrapper
# ----------------------------------------------------------------------------
def make_vae_forward(num_hidden, dims):
    """Build the fused forward fn for fixed (num_hidden, omics dims)."""
    H = int(num_hidden)
    D1, D2, D3 = dims
    Dsum = D1 + D2 + D3
    HP = _round_up(4 * H, 128)        # 3H of hidden + H of folded latent_data
    DP = _round_up(Dsum, 128)         # padded concatenated-input width
    DDP = _round_up(Dsum + H, 128)    # decoders + H of folded latent_data_z

    kernel = functools.partial(_vae_fused_kernel, HP=HP)

    def forward(omics1, omics2, omics3, packed, eps1, eps2, eps3):
        B = omics1.shape[0]

        x_cat = jnp.concatenate([omics1, omics2, omics3], axis=1)
        if DP > Dsum:
            x_cat = jnp.pad(x_cat, ((0, 0), (0, DP - Dsum)))
        eps_cat = jnp.concatenate([eps1, eps2, eps3], axis=1)
        if HP > 3 * H:
            eps_cat = jnp.pad(eps_cat, ((0, 0), (0, HP - 3 * H)))

        heads, dec = pl.pallas_call(
            kernel,
            out_shape=(
                jax.ShapeDtypeStruct((B, 2 * HP), jnp.float32),  # mu|lv|latent slab
                jax.ShapeDtypeStruct((B, DDP), jnp.float32),     # dec|latent_z slab
            ),
            in_specs=[_VMEM] * 6,
            out_specs=[_VMEM] * 2,
        )(
            x_cat, eps_cat,
            packed["w_enc"], packed["w_head"], packed["w_dec"], packed["misc"],
        )

        # Cheap XLA slices back to the 11 module outputs.
        latent_data = heads[:, 3 * H:4 * H]
        latent_data_z = dec[:, Dsum:Dsum + H]
        dec1 = dec[:, 0:D1]
        dec2 = dec[:, D1:D1 + D2]
        dec3 = dec[:, D1 + D2:Dsum]
        mu1 = heads[:, 0:H]
        mu2 = heads[:, H:2 * H]
        mu3 = heads[:, 2 * H:3 * H]
        lv1 = heads[:, HP:HP + H]
        lv2 = heads[:, HP + H:HP + 2 * H]
        lv3 = heads[:, HP + 2 * H:HP + 3 * H]
        return (latent_data, latent_data_z, dec1, dec2, dec3,
                mu1, mu2, mu3, lv1, lv2, lv3)

    return forward


# ----------------------------------------------------------------------------
# Parameter init (PyTorch nn.Linear / nn.BatchNorm1d layout) and packing
# ----------------------------------------------------------------------------
def _linear_params(key, in_dim, out_dim):
    """nn.Linear: weight [out, in], bias [out]. Returned pre-transposed [in,out]."""
    kw, kb = jax.random.split(key)
    bound = 1.0 / jnp.sqrt(jnp.float32(in_dim))
    w = jax.random.uniform(kw, (out_dim, in_dim), jnp.float32, -bound, bound)
    bvec = jax.random.uniform(kb, (out_dim,), jnp.float32, -bound, bound)
    return w.T, bvec


def init_branch_params(key, omics_dim, num_hidden):
    keys = jax.random.split(key, 4)
    w_enc, b_enc = _linear_params(keys[0], omics_dim, num_hidden)
    w_mu, b_mu = _linear_params(keys[1], num_hidden, num_hidden)
    w_lv, b_lv = _linear_params(keys[2], num_hidden, num_hidden)
    w_dec, b_dec = _linear_params(keys[3], num_hidden, omics_dim)
    return {
        "w_enc": w_enc, "b_enc": b_enc,
        # BatchNorm1d affine params at init: weight=1, bias=0.
        "gamma": jnp.ones((num_hidden,), jnp.float32),
        "beta": jnp.zeros((num_hidden,), jnp.float32),
        "w_mu": w_mu, "b_mu": b_mu,
        "w_lv": w_lv, "b_lv": b_lv,
        "w_dec": w_dec, "b_dec": b_dec,
    }


def pack_params(branches, num_hidden, dims, a, b, c):
    """Pack the 3 branches into block-diagonal, lane-padded bf16 kernel weights.

    Combine folds:
      * w_head columns [3H, 4H) of the mu slab hold a/b/c-scaled identities so
        the heads matmul emits latent_data there.
      * w_dec columns [Dsum, Dsum+H) hold a/b/c-scaled identities so the
        decoder matmul emits latent_data_z there.  Rows [3H, HP) of w_dec are
        zero so the latent_data carried in z's pad lanes stays inert.
    Biases / BN affine params live in one f32 `misc` slab:
      row0 = gamma, row1 = beta, row2 = b_head (width 2*HP) | b_dec (width DDP).
    The encoder Linear bias is NOT packed: training-mode BN cancels it.
    """
    H = int(num_hidden)
    D1, D2, D3 = dims
    Dsum = D1 + D2 + D3
    HP = _round_up(4 * H, 128)
    DP = _round_up(Dsum, 128)
    DDP = _round_up(Dsum + H, 128)

    w_enc = jnp.zeros((DP, HP), jnp.float32)
    w_head = jnp.zeros((HP, 2 * HP), jnp.float32)
    w_dec = jnp.zeros((HP, DDP), jnp.float32)
    misc = jnp.zeros((3, 2 * HP + DDP), jnp.float32)

    combine = (a, b, c)
    eye = jnp.eye(H, dtype=jnp.float32)
    d_off = 0
    for i, (br, D) in enumerate(zip(branches, dims)):
        h0 = i * H
        w_enc = w_enc.at[d_off:d_off + D, h0:h0 + H].set(br["w_enc"])
        misc = misc.at[0, h0:h0 + H].set(br["gamma"])
        misc = misc.at[1, h0:h0 + H].set(br["beta"])
        w_head = w_head.at[h0:h0 + H, h0:h0 + H].set(br["w_mu"])
        w_head = w_head.at[h0:h0 + H, HP + h0:HP + h0 + H].set(br["w_lv"])
        w_head = w_head.at[h0:h0 + H, 3 * H:4 * H].set(eye * combine[i])
        misc = misc.at[2, h0:h0 + H].set(br["b_mu"])
        misc = misc.at[2, HP + h0:HP + h0 + H].set(br["b_lv"])
        w_dec = w_dec.at[h0:h0 + H, d_off:d_off + D].set(br["w_dec"])
        w_dec = w_dec.at[h0:h0 + H, Dsum:Dsum + H].set(eye * combine[i])
        misc = misc.at[2, 2 * HP + d_off:2 * HP + d_off + D].set(br["b_dec"])
        d_off += D

    return {
        "w_enc": w_enc.astype(jnp.bfloat16),
        "w_head": w_head.astype(jnp.bfloat16),
        "w_dec": w_dec.astype(jnp.bfloat16),
        "misc": misc,
    }


# ----------------------------------------------------------------------------
# Pure-JAX reference (mirrors the PyTorch module, training-mode BatchNorm, f32)
# ----------------------------------------------------------------------------
def vae_reference(omics, branch_params, eps_list, a, b, c):
    encs, mus, lvs, zs, decs = [], [], [], [], []
    for x, p, eps in zip(omics, branch_params, eps_list):
        y = x @ p["w_enc"] + p["b_enc"]
        mean = jnp.mean(y, axis=0, keepdims=True)
        var = jnp.mean((y - mean) ** 2, axis=0, keepdims=True)
        enc = jax.nn.sigmoid(p["gamma"] * (y - mean) / jnp.sqrt(var + 1e-5) + p["beta"])
        mu = enc @ p["w_mu"] + p["b_mu"]
        lv = enc @ p["w_lv"] + p["b_lv"]
        z = mu + eps * jnp.exp(0.5 * lv)
        dec = z @ p["w_dec"] + p["b_dec"]
        encs.append(enc); mus.append(mu); lvs.append(lv); zs.append(z); decs.append(dec)
    latent = a * encs[0] + b * encs[1] + c * encs[2]
    latent_z = a * zs[0] + b * zs[1] + c * zs[2]
    return (latent, latent_z, decs[0], decs[1], decs[2],
            mus[0], mus[1], mus[2], lvs[0], lvs[1], lvs[2])


# ----------------------------------------------------------------------------
# Main
# ----------------------------------------------------------------------------
if __name__ == "__main__":
    B = 8
    NUM_HIDDEN = 32
    D1, D2, D3 = 48, 64, 40
    A, BW, CW = 0.4, 0.3, 0.3

    root = jax.random.PRNGKey(0)
    k_p1, k_p2, k_p3, k_x1, k_x2, k_x3, k_e1, k_e2, k_e3 = jax.random.split(root, 9)

    branch_params = [
        init_branch_params(k_p1, D1, NUM_HIDDEN),
        init_branch_params(k_p2, D2, NUM_HIDDEN),
        init_branch_params(k_p3, D3, NUM_HIDDEN),
    ]
    packed = pack_params(branch_params, NUM_HIDDEN, (D1, D2, D3), A, BW, CW)

    omics1 = jax.random.normal(k_x1, (B, D1), jnp.float32)
    omics2 = jax.random.normal(k_x2, (B, D2), jnp.float32)
    omics3 = jax.random.normal(k_x3, (B, D3), jnp.float32)

    # torch.randn_like equivalent: noise supplied as an explicit, deterministic
    # input so the kernel and the reference use identical eps.
    eps1 = jax.random.normal(k_e1, (B, NUM_HIDDEN), jnp.float32)
    eps2 = jax.random.normal(k_e2, (B, NUM_HIDDEN), jnp.float32)
    eps3 = jax.random.normal(k_e3, (B, NUM_HIDDEN), jnp.float32)

    fwd = jax.jit(make_vae_forward(NUM_HIDDEN, (D1, D2, D3)))
    outs = fwd(omics1, omics2, omics3, packed, eps1, eps2, eps3)
    outs = jax.block_until_ready(outs)

    (latent, latent_z, dec1, dec2, dec3, mu1, mu2, mu3, lv1, lv2, lv3) = outs
    assert latent.shape == (B, NUM_HIDDEN)
    assert latent_z.shape == (B, NUM_HIDDEN)
    assert dec1.shape == (B, D1) and dec2.shape == (B, D2) and dec3.shape == (B, D3)
    assert mu1.shape == mu2.shape == mu3.shape == (B, NUM_HIDDEN)
    assert lv1.shape == lv2.shape == lv3.shape == (B, NUM_HIDDEN)

    # Numeric check vs the f32 pure-JAX reference. The sigmoid is now exact;
    # the remaining tolerance budget covers the deliberate bf16 cast of the
    # MXU operands (weights + activations) vs the f32 reference weights.
    refs = vae_reference([omics1, omics2, omics3], branch_params,
                         [eps1, eps2, eps3], A, BW, CW)
    for o, r in zip(outs, refs):
        err = float(jnp.max(jnp.abs(o - r)))
        assert err < 5e-2, f"kernel/reference mismatch: max abs err {err}"

    print("KERNEL_OK")
</pallas_src>

<mosaic_0001>
module attributes {stable_mosaic.version = 11 : i64} {
  func.func @_vae_fused_kernel(%arg0: memref<8x256xf32, #tpu.memory_space<vmem>>, %arg1: memref<8x128xf32, #tpu.memory_space<vmem>>, %arg2: memref<256x128xbf16, #tpu.memory_space<vmem>>, %arg3: memref<128x256xbf16, #tpu.memory_space<vmem>>, %arg4: memref<128x256xbf16, #tpu.memory_space<vmem>>, %arg5: memref<3x512xf32, #tpu.memory_space<vmem>>, %arg6: memref<8x256xf32, #tpu.memory_space<vmem>>, %arg7: memref<8x256xf32, #tpu.memory_space<vmem>>) attributes {dimension_semantics = [], scalar_prefetch = 0 : i64, scratch_operands = 0 : i64, tpu.core_type = #tpu.core_type<tc>} {
    %c0 = arith.constant 0 : index
    %c0_0 = arith.constant 0 : index
    %0 = vector.load %arg0[%c0, %c0_0] : memref<8x256xf32, #tpu.memory_space<vmem>>, vector<8x256xf32>
    %1 = arith.truncf %0 : vector<8x256xf32> to vector<8x256xbf16>
    %c0_1 = arith.constant 0 : index
    %c0_2 = arith.constant 0 : index
    %2 = vector.load %arg2[%c0_1, %c0_2] : memref<256x128xbf16, #tpu.memory_space<vmem>>, vector<256x128xbf16>
    %cst = arith.constant dense<0.000000e+00> : vector<8x128xf32>
    %3 = tpu.matmul %1, %2, %cst {dimension_numbers = #tpu.dot_dimension_numbers<[1], [0], [0], [1], [0, 0, 1, 1], [], []>} : vector<8x256xbf16>, vector<256x128xbf16>, vector<8x128xf32> -> vector<8x128xf32>
    %cst_3 = arith.constant dense<0.000000e+00> : vector<128xf32>
    %4 = vector.multi_reduction <add>, %3, %cst_3 [0] : vector<8x128xf32> to vector<128xf32>
    %5 = vector.shape_cast %4 : vector<128xf32> to vector<1x128xf32>
    %cst_4 = arith.constant 8.000000e+00 : f32
    %6 = vector.broadcast %cst_4 : f32 to vector<1x128xf32>
    %7 = arith.divf %5, %6 : vector<1x128xf32>
    %8 = vector.broadcast %7 : vector<1x128xf32> to vector<8x128xf32>
    %9 = arith.subf %3, %8 : vector<8x128xf32>
    %10 = arith.mulf %9, %9 : vector<8x128xf32>
    %cst_5 = arith.constant dense<0.000000e+00> : vector<128xf32>
    %11 = vector.multi_reduction <add>, %10, %cst_5 [0] : vector<8x128xf32> to vector<128xf32>
    %12 = vector.shape_cast %11 : vector<128xf32> to vector<1x128xf32>
    %cst_6 = arith.constant 8.000000e+00 : f32
    %13 = vector.broadcast %cst_6 : f32 to vector<1x128xf32>
    %14 = arith.divf %12, %13 : vector<1x128xf32>
    %c0_7 = arith.constant 0 : index
    %c0_8 = arith.constant 0 : index
    %15 = vector.load %arg5[%c0_7, %c0_8] : memref<3x512xf32, #tpu.memory_space<vmem>>, vector<1x128xf32>
    %c1 = arith.constant 1 : index
    %c0_9 = arith.constant 0 : index
    %16 = vector.load %arg5[%c1, %c0_9] : memref<3x512xf32, #tpu.memory_space<vmem>>, vector<1x128xf32>
    %cst_10 = arith.constant 9.99999974E-6 : f32
    %17 = vector.broadcast %cst_10 : f32 to vector<1x128xf32>
    %18 = arith.addf %14, %17 : vector<1x128xf32>
    %19 = math.rsqrt %18 : vector<1x128xf32>
    %20 = vector.broadcast %19 : vector<1x128xf32> to vector<8x128xf32>
    %21 = arith.mulf %9, %20 : vector<8x128xf32>
    %22 = vector.broadcast %15 : vector<1x128xf32> to vector<8x128xf32>
    %23 = arith.mulf %22, %21 : vector<8x128xf32>
    %24 = vector.broadcast %16 : vector<1x128xf32> to vector<8x128xf32>
    %25 = arith.addf %23, %24 : vector<8x128xf32>
    %cst_11 = arith.constant 0.000000e+00 : f32
    %26 = vector.broadcast %cst_11 : f32 to vector<8x128xf32>
    %27 = arith.subf %26, %25 : vector<8x128xf32>
    %28 = math.exp %27 : vector<8x128xf32>
    %cst_12 = arith.constant 1.000000e+00 : f32
    %29 = vector.broadcast %cst_12 : f32 to vector<8x128xf32>
    %30 = arith.addf %29, %28 : vector<8x128xf32>
    %cst_13 = arith.constant 1.000000e+00 : f32
    %31 = vector.broadcast %cst_13 : f32 to vector<8x128xf32>
    %32 = arith.divf %31, %30 : vector<8x128xf32>
    %c2 = arith.constant 2 : index
    %c0_14 = arith.constant 0 : index
    %33 = vector.load %arg5[%c2, %c0_14] : memref<3x512xf32, #tpu.memory_space<vmem>>, vector<1x256xf32>
    %34 = arith.truncf %32 : vector<8x128xf32> to vector<8x128xbf16>
    %c0_15 = arith.constant 0 : index
    %c0_16 = arith.constant 0 : index
    %35 = vector.load %arg3[%c0_15, %c0_16] : memref<128x256xbf16, #tpu.memory_space<vmem>>, vector<128x256xbf16>
    %cst_17 = arith.constant dense<0.000000e+00> : vector<8x256xf32>
    %36 = tpu.matmul %34, %35, %cst_17 {dimension_numbers = #tpu.dot_dimension_numbers<[1], [0], [0], [1], [0, 0, 1, 1], [], []>} : vector<8x128xbf16>, vector<128x256xbf16>, vector<8x256xf32> -> vector<8x256xf32>
    %37 = vector.broadcast %33 : vector<1x256xf32> to vector<8x256xf32>
    %38 = arith.addf %36, %37 : vector<8x256xf32>
    %c0_18 = arith.constant 0 : index
    %c0_19 = arith.constant 0 : index
    %39 = vector.load %arg6[%c0_18, %c0_19] : memref<8x256xf32, #tpu.memory_space<vmem>>, vector<8x256xf32>
    tpu.vector_store %arg6[%c0_18, %c0_19], %38 {strides = array<i32>} : memref<8x256xf32, #tpu.memory_space<vmem>>, vector<8x256xf32>,
    %40 = vector.extract_strided_slice %38 {offsets = [0, 0], sizes = [8, 128], strides = [1, 1]} : vector<8x256xf32> to vector<8x128xf32>
    %41 = vector.extract_strided_slice %38 {offsets = [0, 128], sizes = [8, 128], strides = [1, 1]} : vector<8x256xf32> to vector<8x128xf32>
    %c0_20 = arith.constant 0 : index
    %c0_21 = arith.constant 0 : index
    %42 = vector.load %arg1[%c0_20, %c0_21] : memref<8x128xf32, #tpu.memory_space<vmem>>, vector<8x128xf32>
    %cst_22 = arith.constant 5.000000e-01 : f32
    %43 = vector.broadcast %cst_22 : f32 to vector<8x128xf32>
    %44 = arith.mulf %43, %41 : vector<8x128xf32>
    %45 = math.exp %44 : vector<8x128xf32>
    %46 = arith.mulf %42, %45 : vector<8x128xf32>
    %47 = arith.addf %40, %46 : vector<8x128xf32>
    %c2_23 = arith.constant 2 : index
    %c256 = arith.constant 256 : index
    %48 = vector.load %arg5[%c2_23, %c256] : memref<3x512xf32, #tpu.memory_space<vmem>>, vector<1x256xf32>
    %49 = arith.truncf %47 : vector<8x128xf32> to vector<8x128xbf16>
    %c0_24 = arith.constant 0 : index
    %c0_25 = arith.constant 0 : index
    %50 = vector.load %arg4[%c0_24, %c0_25] : memref<128x256xbf16, #tpu.memory_space<vmem>>, vector<128x256xbf16>
    %cst_26 = arith.constant dense<0.000000e+00> : vector<8x256xf32>
    %51 = tpu.matmul %49, %50, %cst_26 {dimension_numbers = #tpu.dot_dimension_numbers<[1], [0], [0], [1], [0, 0, 1, 1], [], []>} : vector<8x128xbf16>, vector<128x256xbf16>, vector<8x256xf32> -> vector<8x256xf32>
    %52 = vector.broadcast %48 : vector<1x256xf32> to vector<8x256xf32>
    %53 = arith.addf %51, %52 : vector<8x256xf32>
    %c0_27 = arith.constant 0 : index
    %c0_28 = arith.constant 0 : index
    %54 = vector.load %arg7[%c0_27, %c0_28] : memref<8x256xf32, #tpu.memory_space<vmem>>, vector<8x256xf32>
    tpu.vector_store %arg7[%c0_27, %c0_28], %53 {strides = array<i32>} : memref<8x256xf32, #tpu.memory_space<vmem>>, vector<8x256xf32>,
    return
  }
}

</mosaic_0001>

<llo_original>
// kernel: forward.1
$region0: #{forward.1}
  #allocation0 [shape = 'u32[]', space=smem, size = 0x4, offset = 0x4, fixed_abs, tag = 'smem constant byte address 0x4 - core index']
  #allocation1 [shape = 'u32[72,128]{1,0:T(1,128)}', space=vmem, size = 0x9000, scoped, tag = 'internal scratch']
  %s0 = inlined_call_operand.vmem [shape: f32[8,256], index: 0, kind: input, shape index: {}]
  %s1 = inlined_call_operand.vmem [shape: f32[8,128], index: 1, kind: input, shape index: {}]
  %s2 = inlined_call_operand.hbm [shape: bf16[256,128], index: 2, kind: input, shape index: {}]
  %s3 = inlined_call_operand.hbm [shape: bf16[128,256], index: 3, kind: input, shape index: {}]
  %s4 = inlined_call_operand.hbm [shape: bf16[128,256], index: 4, kind: input, shape index: {}]
  %s5 = inlined_call_operand.vmem [shape: f32[3,512], index: 5, kind: input, shape index: {}]
  %s6 = inlined_call_operand.vmem [shape: f32[8,256], index: 6, kind: output, shape index: {0}]
  %s7 = inlined_call_operand.vmem [shape: f32[8,256], index: 7, kind: output, shape index: {1}]
  %8 = xla_tuple %s6, %s7
  %s9 = sld [smem:[#allocation0]]
  $region54: #{forward.1} parent=0
    _
  %s11 = ssub.s32 1, %s9
  %s12 = scalar_select 0, %s11, %s9
  $region1: #{forward.1} parent=0
    #allocation2 [shape = 'u8[65536]{0}', space=vmem, size = 0x10000, scoped, tag = 'input window, operand 2, single buffered']
    #allocation3 [shape = 's32[1]{0}', space=sflag, size = 0x4, scoped, tag = 'scoped memory for forward.1']
    #allocation4 [shape = 'u8[65536]{0}', space=vmem, size = 0x10000, scoped, tag = 'input window, operand 3, single buffered']
    #allocation5 [shape = 's32[1]{0}', space=sflag, size = 0x4, scoped, tag = 'scoped memory for forward.1']
    #allocation6 [shape = 'u8[65536]{0}', space=vmem, size = 0x10000, scoped, tag = 'input window, operand 4, single buffered']
    %13 = vsyncpa [#allocation3], 0
    %14 = vsyncpa [#allocation5], 0
    // Predicated region
    $region2: #{forward.1} parent=1 // pred_check
      _
    $region3: #{forward.1} parent=1 // pred_check_branch
      %16 = sbr.rel (0) target = $region5
    $region4: #{forward.1} parent=1 // pred_region
      _
    $region5: #{forward.1} parent=1 // pred_fallthru
      _
    // Predicated region
    $region6: #{forward.1} parent=1 // pred_check
      _
    $region7: #{forward.1} parent=1 // pred_check_branch
      %18 = sbr.rel (0) target = $region9
    $region8: #{forward.1} parent=1 // pred_region
      _
    $region9: #{forward.1} parent=1 // pred_fallthru
      _
    // Predicated region
    $region10: #{forward.1} parent=1 // pred_check
      _
    $region11: #{forward.1} parent=1 // pred_check_branch
      %20 = sbr.rel (0) target = $region13
    $region12: #{forward.1} parent=1 // pred_region
      %22 = vsyncadd [#allocation3], 0
      %s23 = sshll.u32 %s2, 4
      %s24 = int_to_ptr.hbm [resolvable:$true] %s23
      %s25 = sshll.u32 [#allocation2], 4
      %s26 = int_to_ptr.vmem [resolvable:$true] %s25
      %31 = dma.hbm_to_vmem [thread:$0]  %s24, 2048, %s26, [#allocation3], 64, 64, 4
    $region13: #{forward.1} parent=1 // pred_fallthru
      _
    // Predicated region
    $region14: #{forward.1} parent=1 // pred_check
      _
    $region15: #{forward.1} parent=1 // pred_check_branch
      %33 = sbr.rel (0) target = $region17
    $region16: #{forward.1} parent=1 // pred_region
      %35 = vsyncadd [#allocation5], 0
      %s36 = sshll.u32 %s3, 4
      %s37 = int_to_ptr.hbm [resolvable:$true] %s36
      %s38 = sshll.u32 [#allocation4], 4
      %s39 = int_to_ptr.vmem [resolvable:$true] %s38
      %44 = dma.hbm_to_vmem [thread:$0]  %s37, 2048, %s39, [#allocation5], 128, 128, 8
    $region17: #{forward.1} parent=1 // pred_fallthru
      _
    // Predicated region
    $region18: #{forward.1} parent=1 // pred_check
      _
    $region19: #{forward.1} parent=1 // pred_check_branch
      %46 = sbr.rel (0) target = $region21
    $region20: #{forward.1} parent=1 // pred_region
      %48 = vsyncadd [#allocation5], 0
      %s49 = sshll.u32 %s4, 4
      %s50 = int_to_ptr.hbm [resolvable:$true] %s49
      %s51 = sshll.u32 [#allocation6], 4
      %s52 = int_to_ptr.vmem [resolvable:$true] %s51
      %57 = dma.hbm_to_vmem [thread:$0]  %s50, 2048, %s52, [#allocation5], 128, 128, 8
    $region21: #{forward.1} parent=1 // pred_fallthru
      _
    // Predicated region
    $region22: #{forward.1} parent=1 // pred_check
      _
    $region23: #{forward.1} parent=1 // pred_check_branch
      %59 = sbr.rel (0) target = $region25
    $region24: #{forward.1} parent=1 // pred_region
      _
    $region25: #{forward.1} parent=1 // pred_fallthru
      _
    // Predicated region
    $region26: #{forward.1} parent=1 // pred_check
      _
    $region27: #{forward.1} parent=1 // pred_check_branch
      %61 = sbr.rel (0) target = $region29
    $region28: #{forward.1} parent=1 // pred_region
      %63 = dma.done [#allocation3], 2048
    $region29: #{forward.1} parent=1 // pred_fallthru
      _
    // Predicated region
    $region30: #{forward.1} parent=1 // pred_check
      _
    $region31: #{forward.1} parent=1 // pred_check_branch
      %65 = sbr.rel (0) target = $region33
    $region32: #{forward.1} parent=1 // pred_region
      %67 = dma.done [#allocation5], 2048
    $region33: #{forward.1} parent=1 // pred_fallthru
      _
    // Predicated region
    $region34: #{forward.1} parent=1 // pred_check
      _
    $region35: #{forward.1} parent=1 // pred_check_branch
      %69 = sbr.rel (0) target = $region37
    $region36: #{forward.1} parent=1 // pred_region
      %71 = dma.done [#allocation5], 2048
    $region37: #{forward.1} parent=1 // pred_fallthru
      _
    %v72 = vld [vmem:[%s0] sm:$0xff]
    %v73 = vld [vmem:[%s0 + $0x8] sm:$0xff]
    %v74 = vpack.c.bf16 %v72, %v72
    %v75 = vpack.c.bf16 %v73, %v73
    %v76 = vld [vmem:[#allocation2] sm:$0xf]
    %v77 = vld [vmem:[#allocation2 + $0x4] sm:$0xf]
    %v78 = vld [vmem:[#allocation2 + $0x8] sm:$0xf]
    %v79 = vld [vmem:[#allocation2 + $0xc] sm:$0xf]
    %v80 = vld [vmem:[#allocation2 + $0x10] sm:$0xf]
    %v81 = vld [vmem:[#allocation2 + $0x14] sm:$0xf]
    %v82 = vld [vmem:[#allocation2 + $0x18] sm:$0xf]
    %v83 = vld [vmem:[#allocation2 + $0x1c] sm:$0xf]
    %v84 = vld [vmem:[#allocation2 + $0x20] sm:$0xf]
    %v85 = vld [vmem:[#allocation2 + $0x24] sm:$0xf]
    %v86 = vld [vmem:[#allocation2 + $0x28] sm:$0xf]
    %v87 = vld [vmem:[#allocation2 + $0x2c] sm:$0xf]
    %v88 = vld [vmem:[#allocation2 + $0x30] sm:$0xf]
    %v89 = vld [vmem:[#allocation2 + $0x34] sm:$0xf]
    %v90 = vld [vmem:[#allocation2 + $0x38] sm:$0xf]
    %v91 = vld [vmem:[#allocation2 + $0x3c] sm:$0xf]
    %v92 = vld [vmem:[#allocation2 + $0x40] sm:$0xf]
    %v93 = vld [vmem:[#allocation2 + $0x44] sm:$0xf]
    %v94 = vld [vmem:[#allocation2 + $0x48] sm:$0xf]
    %v95 = vld [vmem:[#allocation2 + $0x4c] sm:$0xf]
    %v96 = vld [vmem:[#allocation2 + $0x50] sm:$0xf]
    %v97 = vld [vmem:[#allocation2 + $0x54] sm:$0xf]
    %v98 = vld [vmem:[#allocation2 + $0x58] sm:$0xf]
    %v99 = vld [vmem:[#allocation2 + $0x5c] sm:$0xf]
    %v100 = vld [vmem:[#allocation2 + $0x60] sm:$0xf]
    %v101 = vld [vmem:[#allocation2 + $0x64] sm:$0xf]
    %v102 = vld [vmem:[#allocation2 + $0x68] sm:$0xf]
    %v103 = vld [vmem:[#allocation2 + $0x6c] sm:$0xf]
    %v104 = vld [vmem:[#allocation2 + $0x70] sm:$0xf]
    %v105 = vld [vmem:[#allocation2 + $0x74] sm:$0xf]
    %v106 = vld [vmem:[#allocation2 + $0x78] sm:$0xf]
    %v107 = vld [vmem:[#allocation2 + $0x7c] sm:$0xf]
    %v140 = vunpack.c.l.b16 %v76
    %v141 = vunpack.c.l.b16 %v77
    %v142 = vunpack.c.l.b16 %v78
    %v143 = vunpack.c.l.b16 %v79
    %v144 = vunpack.c.l.b16 %v80
    %v145 = vunpack.c.l.b16 %v81
    %v146 = vunpack.c.l.b16 %v82
    %v147 = vunpack.c.l.b16 %v83
    %v148 = vunpack.c.l.b16 %v84
    %v149 = vunpack.c.l.b16 %v85
    %v150 = vunpack.c.l.b16 %v86
    %v151 = vunpack.c.l.b16 %v87
    %v152 = vunpack.c.l.b16 %v88
    %v153 = vunpack.c.l.b16 %v89
    %v154 = vunpack.c.l.b16 %v90
    %v155 = vunpack.c.l.b16 %v91
    %v156 = vunpack.c.l.b16 %v92
    %v157 = vunpack.c.l.b16 %v93
    %v158 = vunpack.c.l.b16 %v94
    %v159 = vunpack.c.l.b16 %v95
    %v160 = vunpack.c.l.b16 %v96
    %v161 = vunpack.c.l.b16 %v97
    %v162 = vunpack.c.l.b16 %v98
    %v163 = vunpack.c.l.b16 %v99
    %v164 = vunpack.c.l.b16 %v100
    %v165 = vunpack.c.l.b16 %v101
    %v166 = vunpack.c.l.b16 %v102
    %v167 = vunpack.c.l.b16 %v103
    %v168 = vunpack.c.l.b16 %v104
    %v169 = vunpack.c.l.b16 %v105
    %v170 = vunpack.c.l.b16 %v106
    %v171 = vunpack.c.l.b16 %v107
    %v172 = vpack.c.b16 %v141, %v140
    %v173 = vpack.c.b16 %v143, %v142
    %v174 = vpack.c.b16 %v145, %v144
    %v175 = vpack.c.b16 %v147, %v146
    %v176 = vpack.c.b16 %v149, %v148
    %v177 = vpack.c.b16 %v151, %v150
    %v178 = vpack.c.b16 %v153, %v152
    %v179 = vpack.c.b16 %v155, %v154
    %v180 = vpack.c.b16 %v157, %v156
    %v181 = vpack.c.b16 %v159, %v158
    %v182 = vpack.c.b16 %v161, %v160
    %v183 = vpack.c.b16 %v163, %v162
    %v184 = vpack.c.b16 %v165, %v164
    %v185 = vpack.c.b16 %v167, %v166
    %v186 = vpack.c.b16 %v169, %v168
    %v187 = vpack.c.b16 %v171, %v170
    %204 = vmatpush.bf16.msra.mxu0 %v179
    %205 = vmatpush.bf16.msra.mxu0 %v178
    %206 = vmatpush.bf16.msra.mxu0 %v177
    %207 = vmatpush.bf16.msra.mxu0 %v176
    %208 = vmatpush.bf16.msra.mxu0 %v175
    %209 = vmatpush.bf16.msra.mxu0 %v174
    %210 = vmatpush.bf16.msra.mxu0 %v173
    %211 = vmatpush.bf16.msra.mxu0 %v172
    %212 = vmatmul.bf16.gmra.mxu0 %v74
    %v213 = vpop.f32.mrf.mxu0
    %v214 = vadd.f32 0.0, %v213
    %v215 = vpop.f32.mrf.mxu0
    %216 = vdwg.mxu0
    %217 = vmatpush.bf16.msra.mxu0 %v187
    %218 = vmatpush.bf16.msra.mxu0 %v186
    %219 = vmatpush.bf16.msra.mxu0 %v185
    %220 = vmatpush.bf16.msra.mxu0 %v184
    %221 = vmatpush.bf16.msra.mxu0 %v183
    %222 = vmatpush.bf16.msra.mxu0 %v182
    %223 = vmatpush.bf16.msra.mxu0 %v181
    %224 = vmatpush.bf16.msra.mxu0 %v180
    %225 = vmatmul.bf16.gmra.mxu0 %v75
    %v226 = vpop.f32.mrf.mxu0
    %v227 = vadd.f32 %v214, %v226
    %v228 = vpop.f32.mrf.mxu0
    %229 = vdwg.mxu0
    %v230 = vrot.slane %v227, 4
    %v231 = vadd.f32 %v227, %v230
    %v232 = vrot.slane %v231, 2
    %v233 = vadd.f32 %v231, %v232
    %v234 = vrot.slane %v233, 1
    %v235 = vadd.f32 %v233, %v234
    %v236 = vrcp.pop 8.0
    %v237 = vmul.f32 8.0, %v236
    %v238 = vsub.f32 1.0, %v237
    %v239 = vmul.f32 %v236, %v238
    %v240 = vadd.f32 %v236, %v239
    %vm241 = vweird.f32 %v236
    %v242 = vsel %vm241, %v236, %v240
    %v243 = vmul.f32 %v235, %v242
    %v244 = vsub.f32 %v227, %v243
    %v245 = vmul.f32 %v244, %v244
    %v246 = vrot.slane %v245, 4
    %v247 = vadd.f32 %v245, %v246
    %v248 = vrot.slane %v247, 2
    %v249 = vadd.f32 %v247, %v248
    %v250 = vrot.slane %v249, 1
    %v251 = vadd.f32 %v249, %v250
    %v252 = vmul.f32 %v251, %v242
    %v253 = vld [vmem:[%s5] sm:$0x1]
    %v254 = vld [vmem:[%s5 + $0x1] sm:$0x1]
    %v255 = vadd.f32 %v252, 1e-05
    %v256 = vrsqrt.pop %v255
    %v257 = vmul.f32 %v256, %v255
    %v258 = vmul.f32 %v257, %v256
    %v259 = vmul.f32 0.5, %v258
    %v260 = vsub.f32 1.5, %v259
    %v261 = vmul.f32 %v256, %v260
    %vm262 = vweird.f32 %v255
    %vm263 = vweird.f32 %v256
    %vm264 = vmor %vm262, %vm263
    %v265 = vsel %vm264, %v256, %v261
    %v266 = vmul.f32 %v244, %v265
    %v267 = vperm.slane %v253, 0
    %v268 = vmul.f32 %v267, %v266
    %v269 = vperm.slane %v254, 0
    %v270 = vadd.f32 %v268, %v269
    %v271 = vsub.f32 0.0, %v270
    %v272 = vmul.f32 %v271, 1.442695
    %v273 = vpow.pop %v272
    %v274 = vadd.f32 %v273, 1.0
    %v275 = vrcp.pop %v274
    %v276 = vmul.f32 %v274, %v275
    %v277 = vsub.f32 1.0, %v276
    %v278 = vmul.f32 %v275, %v277
    %v279 = vadd.f32 %v275, %v278
    %vm280 = vweird.f32 %v274
    %vm281 = vweird.f32 %v275
    %vm282 = vmor %vm280, %vm281
    %v283 = vsel %vm282, %v275, %v279
    %v284 = vand.u32 2147483647, %v274
    %vm285 = vcmp.eq.f32.partialorder %v284, 8.507059e+37
    %v286 = vand.u32 %v274, 2147483648
    %v287 = vor.u32 1.1754944e-38, %v286
    %v288 = vsel %vm285, %v287, %v283
    %v289 = vmul.f32 1.0, %v288
    %s290 = scalar_lea.vmem %s5, 2
    %v291 = vld [vmem:[%s290] ss:$4 sm:$0x3]
    %v292 = vpack.c.bf16 %v289, %v289
    %v293 = vld [vmem:[#allocation4] sm:$0xff]
    %v294 = vld [vmem:[#allocation4 + $0x8] sm:$0xff]
    %v295 = vld [vmem:[#allocation4 + $0x10] sm:$0xff]
    %v296 = vld [vmem:[#allocation4 + $0x18] sm:$0xff]
    %v297 = vld [vmem:[#allocation4 + $0x20] sm:$0xff]
    %v298 = vld [vmem:[#allocation4 + $0x28] sm:$0xff]
    %v299 = vld [vmem:[#allocation4 + $0x30] sm:$0xff]
    %v300 = vld [vmem:[#allocation4 + $0x38] sm:$0xff]
    %v301 = vld [vmem:[#allocation4 + $0x40] sm:$0xff]
    %v302 = vld [vmem:[#allocation4 + $0x48] sm:$0xff]
    %v303 = vld [vmem:[#allocation4 + $0x50] sm:$0xff]
    %v304 = vld [vmem:[#allocation4 + $0x58] sm:$0xff]
    %v305 = vld [vmem:[#allocation4 + $0x60] sm:$0xff]
    %v306 = vld [vmem:[#allocation4 + $0x68] sm:$0xff]
    %v307 = vld [vmem:[#allocation4 + $0x70] sm:$0xff]
    %v308 = vld [vmem:[#allocation4 + $0x78] sm:$0xff]
    %v310 = vperm.slane %v291, 0
    %v311 = vperm.slane %v291, 1
    %v330 = vunpack.c.l.b16 %v293
    %v331 = vunpack.c.h.b16 %v293
    %v332 = vunpack.c.l.b16 %v294
    %v333 = vunpack.c.h.b16 %v294
    %v334 = vunpack.c.l.b16 %v295
    %v335 = vunpack.c.h.b16 %v295
    %v336 = vunpack.c.l.b16 %v296
    %v337 = vunpack.c.h.b16 %v296
    %v338 = vunpack.c.l.b16 %v297
    %v339 = vunpack.c.h.b16 %v297
    %v340 = vunpack.c.l.b16 %v298
    %v341 = vunpack.c.h.b16 %v298
    %v342 = vunpack.c.l.b16 %v299
    %v343 = vunpack.c.h.b16 %v299
    %v344 = vunpack.c.l.b16 %v300
    %v345 = vunpack.c.h.b16 %v300
    %v346 = vunpack.c.l.b16 %v301
    %v347 = vunpack.c.h.b16 %v301
    %v348 = vunpack.c.l.b16 %v302
    %v349 = vunpack.c.h.b16 %v302
    %v350 = vunpack.c.l.b16 %v303
    %v351 = vunpack.c.h.b16 %v303
    %v352 = vunpack.c.l.b16 %v304
    %v353 = vunpack.c.h.b16 %v304
    %v354 = vunpack.c.l.b16 %v305
    %v355 = vunpack.c.h.b16 %v305
    %v356 = vunpack.c.l.b16 %v306
    %v357 = vunpack.c.h.b16 %v306
    %v358 = vunpack.c.l.b16 %v307
    %v359 = vunpack.c.h.b16 %v307
    %v360 = vunpack.c.l.b16 %v308
    %v361 = vunpack.c.h.b16 %v308
    %v362 = vpack.c.b16 %v332, %v330
    %v363 = vpack.c.b16 %v333, %v331
    %v364 = vpack.c.b16 %v336, %v334
    %v365 = vpack.c.b16 %v337, %v335
    %v366 = vpack.c.b16 %v340, %v338
    %v367 = vpack.c.b16 %v341, %v339
    %v368 = vpack.c.b16 %v344, %v342
    %v369 = vpack.c.b16 %v345, %v343
    %v370 = vpack.c.b16 %v348, %v346
    %v371 = vpack.c.b16 %v349, %v347
    %v372 = vpack.c.b16 %v352, %v350
    %v373 = vpack.c.b16 %v353, %v351
    %v374 = vpack.c.b16 %v356, %v354
    %v375 = vpack.c.b16 %v357, %v355
    %v376 = vpack.c.b16 %v360, %v358
    %v377 = vpack.c.b16 %v361, %v359
    %394 = vmatpush.bf16.msra.mxu0 %v376
    %395 = vmatpush.bf16.msra.mxu0 %v374
    %396 = vmatpush.bf16.msra.mxu0 %v372
    %397 = vmatpush.bf16.msra.mxu0 %v370
    %398 = vmatpush.bf16.msra.mxu0 %v368
    %399 = vmatpush.bf16.msra.mxu0 %v366
    %400 = vmatpush.bf16.msra.mxu0 %v364
    %401 = vmatpush.bf16.msra.mxu0 %v362
    %402 = vmatmul.bf16.gmra.mxu0 %v292
    %v403 = vpop.f32.mrf.mxu0
    %v404 = vadd.f32 %v310, %v403
    %v405 = vpop.f32.mrf.mxu0
    %406 = vdwg.mxu0
    %407 = vmatpush.bf16.msra.mxu0 %v377
    %408 = vmatpush.bf16.msra.mxu0 %v375
    %409 = vmatpush.bf16.msra.mxu0 %v373
    %410 = vmatpush.bf16.msra.mxu0 %v371
    %411 = vmatpush.bf16.msra.mxu0 %v369
    %412 = vmatpush.bf16.msra.mxu0 %v367
    %413 = vmatpush.bf16.msra.mxu0 %v365
    %414 = vmatpush.bf16.msra.mxu0 %v363
    %415 = vmatmul.bf16.gmra.mxu0 %v292
    %v416 = vpop.f32.mrf.mxu0
    %v417 = vadd.f32 %v311, %v416
    %v418 = vpop.f32.mrf.mxu0
    %419 = vdwg.mxu0
    %420 = vst [vmem:[%s6] sm:$0xff] %v404
    %421 = vst [vmem:[%s6 + $0x8] sm:$0xff] %v417
    %v422 = vld [vmem:[%s1] sm:$0xff]
    %v423 = vmul.f32 %v417, 0.5
    %v424 = vmul.f32 %v423, 1.442695
    %v425 = vpow.pop %v424
    %v426 = vmul.f32 %v422, %v425
    %v427 = vadd.f32 %v404, %v426
    %s428 = scalar_lea.vmem %s5, 10
    %v429 = vld [vmem:[%s428] ss:$4 sm:$0x3]
    %v430 = vpack.c.bf16 %v427, %v427
    %v431 = vld [vmem:[#allocation6] sm:$0xff]
    %v432 = vld [vmem:[#allocation6 + $0x8] sm:$0xff]
    %v433 = vld [vmem:[#allocation6 + $0x10] sm:$0xff]
    %v434 = vld [vmem:[#allocation6 + $0x18] sm:$0xff]
    %v435 = vld [vmem:[#allocation6 + $0x20] sm:$0xff]
    %v436 = vld [vmem:[#allocation6 + $0x28] sm:$0xff]
    %v437 = vld [vmem:[#allocation6 + $0x30] sm:$0xff]
    %v438 = vld [vmem:[#allocation6 + $0x38] sm:$0xff]
    %v439 = vld [vmem:[#allocation6 + $0x40] sm:$0xff]
    %v440 = vld [vmem:[#allocation6 + $0x48] sm:$0xff]
    %v441 = vld [vmem:[#allocation6 + $0x50] sm:$0xff]
    %v442 = vld [vmem:[#allocation6 + $0x58] sm:$0xff]
    %v443 = vld [vmem:[#allocation6 + $0x60] sm:$0xff]
    %v444 = vld [vmem:[#allocation6 + $0x68] sm:$0xff]
    %v445 = vld [vmem:[#allocation6 + $0x70] sm:$0xff]
    %v446 = vld [vmem:[#allocation6 + $0x78] sm:$0xff]
    %v448 = vperm.slane %v429, 0
    %v449 = vperm.slane %v429, 1
    %v468 = vunpack.c.l.b16 %v431
    %v469 = vunpack.c.h.b16 %v431
    %v470 = vunpack.c.l.b16 %v432
    %v471 = vunpack.c.h.b16 %v432
    %v472 = vunpack.c.l.b16 %v433
    %v473 = vunpack.c.h.b16 %v433
    %v474 = vunpack.c.l.b16 %v434
    %v475 = vunpack.c.h.b16 %v434
    %v476 = vunpack.c.l.b16 %v435
    %v477 = vunpack.c.h.b16 %v435
    %v478 = vunpack.c.l.b16 %v436
    %v479 = vunpack.c.h.b16 %v436
    %v480 = vunpack.c.l.b16 %v437
    %v481 = vunpack.c.h.b16 %v437
    %v482 = vunpack.c.l.b16 %v438
    %v483 = vunpack.c.h.b16 %v438
    %v484 = vunpack.c.l.b16 %v439
    %v485 = vunpack.c.h.b16 %v439
    %v486 = vunpack.c.l.b16 %v440
    %v487 = vunpack.c.h.b16 %v440
    %v488 = vunpack.c.l.b16 %v441
    %v489 = vunpack.c.h.b16 %v441
    %v490 = vunpack.c.l.b16 %v442
    %v491 = vunpack.c.h.b16 %v442
    %v492 = vunpack.c.l.b16 %v443
    %v493 = vunpack.c.h.b16 %v443
    %v494 = vunpack.c.l.b16 %v444
    %v495 = vunpack.c.h.b16 %v444
    %v496 = vunpack.c.l.b16 %v445
    %v497 = vunpack.c.h.b16 %v445
    %v498 = vunpack.c.l.b16 %v446
    %v499 = vunpack.c.h.b16 %v446
    %v500 = vpack.c.b16 %v470, %v468
    %v501 = vpack.c.b16 %v471, %v469
    %v502 = vpack.c.b16 %v474, %v472
    %v503 = vpack.c.b16 %v475, %v473
    %v504 = vpack.c.b16 %v478, %v476
    %v505 = vpack.c.b16 %v479, %v477
    %v506 = vpack.c.b16 %v482, %v480
    %v507 = vpack.c.b16 %v483, %v481
    %v508 = vpack.c.b16 %v486, %v484
    %v509 = vpack.c.b16 %v487, %v485
    %v510 = vpack.c.b16 %v490, %v488
    %v511 = vpack.c.b16 %v491, %v489
    %v512 = vpack.c.b16 %v494, %v492
    %v513 = vpack.c.b16 %v495, %v493
    %v514 = vpack.c.b16 %v498, %v496
    %v515 = vpack.c.b16 %v499, %v497
    %532 = vmatpush.bf16.msra.mxu0 %v514
    %533 = vmatpush.bf16.msra.mxu0 %v512
    %534 = vmatpush.bf16.msra.mxu0 %v510
    %535 = vmatpush.bf16.msra.mxu0 %v508
    %536 = vmatpush.bf16.msra.mxu0 %v506
    %537 = vmatpush.bf16.msra.mxu0 %v504
    %538 = vmatpush.bf16.msra.mxu0 %v502
    %539 = vmatpush.bf16.msra.mxu0 %v500
    %540 = vmatmul.bf16.gmra.mxu0 %v430
    %v541 = vpop.f32.mrf.mxu0
    %v542 = vadd.f32 %v448, %v541
    %v543 = vpop.f32.mrf.mxu0
    %544 = vdwg.mxu0
    %545 = vmatpush.bf16.msra.mxu0 %v515
    %546 = vmatpush.bf16.msra.mxu0 %v513
    %547 = vmatpush.bf16.msra.mxu0 %v511
    %548 = vmatpush.bf16.msra.mxu0 %v509
    %549 = vmatpush.bf16.msra.mxu0 %v507
    %550 = vmatpush.bf16.msra.mxu0 %v505
    %551 = vmatpush.bf16.msra.mxu0 %v503
    %552 = vmatpush.bf16.msra.mxu0 %v501
    %553 = vmatmul.bf16.gmra.mxu0 %v430
    %v554 = vpop.f32.mrf.mxu0
    %v555 = vadd.f32 %v449, %v554
    %v556 = vpop.f32.mrf.mxu0
    %557 = vdwg.mxu0
    %558 = vst [vmem:[%s7] sm:$0xff] %v542
    %559 = vst [vmem:[%s7 + $0x8] sm:$0xff] %v555
    // Predicated region
    $region38: #{forward.1} parent=1 // pred_check
      _
    $region39: #{forward.1} parent=1 // pred_check_branch
      %561 = sbr.rel (0) target = $region41
    $region40: #{forward.1} parent=1 // pred_region
      _
    $region41: #{forward.1} parent=1 // pred_fallthru
      _
    // Predicated region
    $region42: #{forward.1} parent=1 // pred_check
      _
    $region43: #{forward.1} parent=1 // pred_check_branch
      %563 = sbr.rel (0) target = $region45
    $region44: #{forward.1} parent=1 // pred_region
      _
    $region45: #{forward.1} parent=1 // pred_fallthru
      _
    // Predicated region
    $region46: #{forward.1} parent=1 // pred_check
      _
    $region47: #{forward.1} parent=1 // pred_check_branch
      %565 = sbr.rel (0) target = $region49
    $region48: #{forward.1} parent=1 // pred_region
      _
    $region49: #{forward.1} parent=1 // pred_fallthru
      _
    // Predicated region
    $region50: #{forward.1} parent=1 // pred_check
      _
    $region51: #{forward.1} parent=1 // pred_check_branch
      %567 = sbr.rel (0) target = $region53
    $region52: #{forward.1} parent=1 // pred_region
      _
    $region53: #{forward.1} parent=1 // pred_fallthru
      _
    %568 = vsyncpa [#allocation3], 1
    %569 = vsyncpa [#allocation5], 1

</llo_original>
